<compile_context>
chip_gen: v5e
topology: v5e:2x2
jax: 0.10.0
libtpu: 0.0.40
codegen_flags: <defaults>
</compile_context>

<pallas_src>
import math
import functools

import jax
import jax.numpy as jnp
from jax.experimental import pallas as pl
from jax.experimental.pallas import tpu as pltpu

# ---- model dimensions (scaled-down roberta) ----
B = 2          # batch
S = 8          # sequence length
H = 128        # hidden size (stands in for 1024)
NUM_HEADS = 2
HEAD_DIM = H // NUM_HEADS
FFN = 256      # intermediate size (stands in for 4096)
VOCAB = 64
LN_EPS = 1e-5
BS = B * S
OUT_LANES = 128   # lane-dense output width


def bert_arch_kernel(
    bias_ref,                       # (BS, BS) additive attention bias (block-diag + key pad)
    x_ref,                          # (BS, H)  word + position embeddings (f32)
    lne_g_ref, lne_b_ref,           # (1, H)   embedding layernorm
    wqkv_ref,                       # (H, 3H)  bf16 fused Q|K|V weights (Wq pre-scaled)
    bqkv_ref,                       # (1, 3H)  f32 fused biases (bq pre-scaled)
    wo_ref, bo_ref,                 # (H, H) bf16, (1, H) f32   attention output proj
    ln1_g_ref, ln1_b_ref,           # (1, H)
    w1_ref, b1_ref,                 # (H, FFN) bf16, (1, FFN) f32
    w2_ref, b2_ref,                 # (FFN, H) bf16, (1, H) f32
    ln2_g_ref, ln2_b_ref,           # (1, H)
    wp_ref, bp_ref,                 # (H, H) bf16, (1, H) f32    pooler
    wfc_ref, bfc_ref,               # (1, H) f32, (1, 1) f32     fc1: Linear(H, 1)
    out_ref,                        # (BS, OUT_LANES) f32 lane-dense logits slab
):
    x = x_ref[...]                  # (BS, H) f32
    bias = bias_ref[...]            # (BS, BS) f32

    def layer_norm(v, g, b):
        mu = jnp.mean(v, axis=-1, keepdims=True)
        var = jnp.mean((v - mu) * (v - mu), axis=-1, keepdims=True)
        return (v - mu) * jax.lax.rsqrt(var + LN_EPS) * g + b

    # embedding layernorm (f32)
    x = layer_norm(x, lne_g_ref[...], lne_b_ref[...])
    xb = x.astype(jnp.bfloat16)

    # ---- self-attention ----
    # One lane-dense N=3H fused projection (scale already folded into Wq / bq).
    qkv = jnp.dot(xb, wqkv_ref[...], preferred_element_type=jnp.float32) + bqkv_ref[...]
    qkv_b = qkv.astype(jnp.bfloat16)                          # (BS, 3H)

    ctx_heads = []
    for h in range(NUM_HEADS):                                # static loop over heads
        lo = h * HEAD_DIM
        q_h = qkv_b[:, lo:lo + HEAD_DIM]                      # (BS, HD)
        k_h = qkv_b[:, H + lo:H + lo + HEAD_DIM]              # (BS, HD)
        v_h = qkv_b[:, 2 * H + lo:2 * H + lo + HEAD_DIM]      # (BS, HD)

        s = jax.lax.dot_general(
            q_h, k_h, (((1,), (1,)), ((), ())),
            preferred_element_type=jnp.float32,
        ) + bias                                              # (BS, BS)
        s = s - jnp.max(s, axis=-1, keepdims=True)
        p = jnp.exp(s)
        p = p * pl.reciprocal(jnp.sum(p, axis=-1, keepdims=True), approx=True)

        ctx_heads.append(
            jnp.dot(p.astype(jnp.bfloat16), v_h, preferred_element_type=jnp.float32)
        )                                                     # (BS, HD)

    # Single K=H output projection on the concatenated head contexts.
    ctx = jnp.concatenate(ctx_heads, axis=-1).astype(jnp.bfloat16)       # (BS, H)
    attn = jnp.dot(ctx, wo_ref[...], preferred_element_type=jnp.float32) + bo_ref[...]

    x1 = layer_norm(x + attn, ln1_g_ref[...], ln1_b_ref[...])

    # ---- feed-forward ----
    # TODO(synk): HF RoBERTa uses exact erf GELU; tanh approximation used here.
    hmid = jax.nn.gelu(
        jnp.dot(x1.astype(jnp.bfloat16), w1_ref[...],
                preferred_element_type=jnp.float32) + b1_ref[...],
        approximate=True,
    )
    ffn = jnp.dot(hmid.astype(jnp.bfloat16), w2_ref[...],
                  preferred_element_type=jnp.float32) + b2_ref[...]
    x2 = layer_norm(x1 + ffn, ln2_g_ref[...], ln2_b_ref[...])

    # ---- pooler: tanh(dense(.)) on all BS rows (CLS rows selected in wrapper) ----
    pooled = jnp.tanh(
        jnp.dot(x2.astype(jnp.bfloat16), wp_ref[...],
                preferred_element_type=jnp.float32) + bp_ref[...]
    )                                                         # (BS, H)

    # ---- fc1: Linear(H, 1) on all rows ----
    logits_all = jnp.sum(pooled * wfc_ref[...], axis=-1, keepdims=True) + bfc_ref[...]

    # Lane-dense store: broadcast the (BS, 1) logits across the full 128-lane slab.
    out_ref[...] = jnp.broadcast_to(logits_all, (BS, OUT_LANES))


def make_params(key):
    def dense(k, shape, scale=0.02):
        return (scale * jax.random.normal(k, shape)).astype(jnp.float32)

    ks = jax.random.split(key, 16)
    p = {
        "word_emb": dense(ks[0], (VOCAB, H)),
        "pos_emb": dense(ks[1], (S, H)),
        "lne_g": jnp.ones((1, H), jnp.float32), "lne_b": jnp.zeros((1, H), jnp.float32),
        "wq": dense(ks[2], (H, H)), "bq": jnp.zeros((1, H), jnp.float32),
        "wk": dense(ks[3], (H, H)), "bk": jnp.zeros((1, H), jnp.float32),
        "wv": dense(ks[4], (H, H)), "bv": jnp.zeros((1, H), jnp.float32),
        "wo": dense(ks[5], (H, H)), "bo": jnp.zeros((1, H), jnp.float32),
        "ln1_g": jnp.ones((1, H), jnp.float32), "ln1_b": jnp.zeros((1, H), jnp.float32),
        "w1": dense(ks[6], (H, FFN)), "b1": jnp.zeros((1, FFN), jnp.float32),
        "w2": dense(ks[7], (FFN, H)), "b2": jnp.zeros((1, H), jnp.float32),
        "ln2_g": jnp.ones((1, H), jnp.float32), "ln2_b": jnp.zeros((1, H), jnp.float32),
        "wp": dense(ks[8], (H, H)), "bp": jnp.zeros((1, H), jnp.float32),
        "wfc": dense(ks[9], (1, H)), "bfc": jnp.zeros((1, 1), jnp.float32),
    }
    return p


@functools.partial(jax.jit, static_argnames=())
def bert_arch_forward(sent_id, mask, params):
    # --- embedding glue (plain JAX) ---
    emb = (
        jnp.take(params["word_emb"], sent_id, axis=0)
        + params["pos_emb"][None, :, :]
    ).astype(jnp.float32)                                   # (B, S, H)
    x_flat = emb.reshape(BS, H)                             # fold batch: (B*S, H)

    # block-diagonal (no cross-sequence attention) + key-padding additive mask
    # TODO(synk): at full scale build this mask in-kernel from key_valid/batch_id vectors
    # instead of materializing an O((B*S)^2) f32 tensor.
    key_valid = mask.reshape(-1) > 0                        # (BS,)
    batch_id = jnp.repeat(jnp.arange(B), S)                 # (BS,)
    allowed = (batch_id[:, None] == batch_id[None, :]) & key_valid[None, :]
    bias2d = jnp.where(allowed, 0.0, -1e9).astype(jnp.float32)  # (BS, BS)

    bf16 = jnp.bfloat16
    scale = 1.0 / math.sqrt(HEAD_DIM)

    # fused QKV weights / biases; 1/sqrt(HEAD_DIM) folded into the Q part
    wqkv = jnp.concatenate(
        [params["wq"] * scale, params["wk"], params["wv"]], axis=1
    ).astype(bf16)                                          # (H, 3H)
    bqkv = jnp.concatenate(
        [params["bq"] * scale, params["bk"], params["bv"]], axis=1
    ).astype(jnp.float32)                                   # (1, 3H)

    inputs = [
        bias2d, x_flat,
        params["lne_g"], params["lne_b"],
        wqkv, bqkv,
        params["wo"].astype(bf16), params["bo"],
        params["ln1_g"], params["ln1_b"],
        params["w1"].astype(bf16), params["b1"],
        params["w2"].astype(bf16), params["b2"],
        params["ln2_g"], params["ln2_b"],
        params["wp"].astype(bf16), params["bp"],
        params["wfc"], params["bfc"],
    ]

    # single grid step, single-buffered whole-array VMEM residency for everything
    in_specs = [pl.BlockSpec(memory_space=pltpu.MemorySpace.VMEM) for _ in inputs]
    out_full = pl.pallas_call(
        bert_arch_kernel,
        out_shape=jax.ShapeDtypeStruct((BS, OUT_LANES), jnp.float32),
        in_specs=in_specs,
        out_specs=pl.BlockSpec(memory_space=pltpu.MemorySpace.VMEM),
    )(*inputs)                                              # (BS, 128) lane-dense slab

    # select each sequence's CLS row (row 0) and lane 0 -> (B, 1) fc1 output
    logits = out_full.reshape(B, S, OUT_LANES)[:, 0, 0:1]
    return logits


if __name__ == "__main__":
    key = jax.random.PRNGKey(0)
    k_tok, k_params = jax.random.split(key)

    sent_id = jax.random.randint(k_tok, (B, S), 0, VOCAB, dtype=jnp.int32)
    # valid-token mask: second sequence has 2 padding positions at the end
    lengths = jnp.array([S, S - 2], dtype=jnp.int32)
    mask = (jnp.arange(S)[None, :] < lengths[:, None]).astype(jnp.int32)

    params = make_params(k_params)

    x = bert_arch_forward(sent_id, mask, params)
    x = jax.block_until_ready(x)
    assert x.shape == (B, 1) and x.dtype == jnp.float32
    print("KERNEL_OK")
</pallas_src>

<mosaic_0001>
module attributes {stable_mosaic.version = 11 : i64} {
  func.func @bert_arch_kernel(%arg0: memref<16x16xf32, #tpu.memory_space<vmem>>, %arg1: memref<16x128xf32, #tpu.memory_space<vmem>>, %arg2: memref<1x128xf32, #tpu.memory_space<vmem>>, %arg3: memref<1x128xf32, #tpu.memory_space<vmem>>, %arg4: memref<128x384xbf16, #tpu.memory_space<vmem>>, %arg5: memref<1x384xf32, #tpu.memory_space<vmem>>, %arg6: memref<128x128xbf16, #tpu.memory_space<vmem>>, %arg7: memref<1x128xf32, #tpu.memory_space<vmem>>, %arg8: memref<1x128xf32, #tpu.memory_space<vmem>>, %arg9: memref<1x128xf32, #tpu.memory_space<vmem>>, %arg10: memref<128x256xbf16, #tpu.memory_space<vmem>>, %arg11: memref<1x256xf32, #tpu.memory_space<vmem>>, %arg12: memref<256x128xbf16, #tpu.memory_space<vmem>>, %arg13: memref<1x128xf32, #tpu.memory_space<vmem>>, %arg14: memref<1x128xf32, #tpu.memory_space<vmem>>, %arg15: memref<1x128xf32, #tpu.memory_space<vmem>>, %arg16: memref<128x128xbf16, #tpu.memory_space<vmem>>, %arg17: memref<1x128xf32, #tpu.memory_space<vmem>>, %arg18: memref<1x128xf32, #tpu.memory_space<vmem>>, %arg19: memref<1x1xf32, #tpu.memory_space<vmem>>, %arg20: memref<16x128xf32, #tpu.memory_space<vmem>>) attributes {dimension_semantics = [], scalar_prefetch = 0 : i64, scratch_operands = 0 : i64, tpu.core_type = #tpu.core_type<tc>} {
    %c0 = arith.constant 0 : index
    %c0_0 = arith.constant 0 : index
    %0 = vector.load %arg1[%c0, %c0_0] : memref<16x128xf32, #tpu.memory_space<vmem>>, vector<16x128xf32>
    %c0_1 = arith.constant 0 : index
    %c0_2 = arith.constant 0 : index
    %1 = vector.load %arg0[%c0_1, %c0_2] : memref<16x16xf32, #tpu.memory_space<vmem>>, vector<16x16xf32>
    %c0_3 = arith.constant 0 : index
    %c0_4 = arith.constant 0 : index
    %2 = vector.load %arg2[%c0_3, %c0_4] : memref<1x128xf32, #tpu.memory_space<vmem>>, vector<1x128xf32>
    %c0_5 = arith.constant 0 : index
    %c0_6 = arith.constant 0 : index
    %3 = vector.load %arg3[%c0_5, %c0_6] : memref<1x128xf32, #tpu.memory_space<vmem>>, vector<1x128xf32>
    %cst = arith.constant dense<0.000000e+00> : vector<16xf32>
    %4 = vector.multi_reduction <add>, %0, %cst [1] : vector<16x128xf32> to vector<16xf32>
    %5 = vector.shape_cast %4 : vector<16xf32> to vector<16x1xf32>
    %cst_7 = arith.constant 1.280000e+02 : f32
    %6 = vector.broadcast %cst_7 : f32 to vector<16x1xf32>
    %7 = arith.divf %5, %6 : vector<16x1xf32>
    %8 = vector.broadcast %7 : vector<16x1xf32> to vector<16x128xf32>
    %9 = arith.subf %0, %8 : vector<16x128xf32>
    %10 = vector.broadcast %7 : vector<16x1xf32> to vector<16x128xf32>
    %11 = arith.subf %0, %10 : vector<16x128xf32>
    %12 = arith.mulf %9, %11 : vector<16x128xf32>
    %cst_8 = arith.constant dense<0.000000e+00> : vector<16xf32>
    %13 = vector.multi_reduction <add>, %12, %cst_8 [1] : vector<16x128xf32> to vector<16xf32>
    %14 = vector.shape_cast %13 : vector<16xf32> to vector<16x1xf32>
    %cst_9 = arith.constant 1.280000e+02 : f32
    %15 = vector.broadcast %cst_9 : f32 to vector<16x1xf32>
    %16 = arith.divf %14, %15 : vector<16x1xf32>
    %17 = vector.broadcast %7 : vector<16x1xf32> to vector<16x128xf32>
    %18 = arith.subf %0, %17 : vector<16x128xf32>
    %cst_10 = arith.constant 9.99999974E-6 : f32
    %19 = vector.broadcast %cst_10 : f32 to vector<16x1xf32>
    %20 = arith.addf %16, %19 : vector<16x1xf32>
    %21 = math.rsqrt %20 : vector<16x1xf32>
    %22 = vector.broadcast %21 : vector<16x1xf32> to vector<16x128xf32>
    %23 = arith.mulf %18, %22 : vector<16x128xf32>
    %24 = vector.broadcast %2 : vector<1x128xf32> to vector<16x128xf32>
    %25 = arith.mulf %23, %24 : vector<16x128xf32>
    %26 = vector.broadcast %3 : vector<1x128xf32> to vector<16x128xf32>
    %27 = arith.addf %25, %26 : vector<16x128xf32>
    %28 = arith.truncf %27 : vector<16x128xf32> to vector<16x128xbf16>
    %c0_11 = arith.constant 0 : index
    %c0_12 = arith.constant 0 : index
    %29 = vector.load %arg4[%c0_11, %c0_12] : memref<128x384xbf16, #tpu.memory_space<vmem>>, vector<128x384xbf16>
    %cst_13 = arith.constant dense<0.000000e+00> : vector<16x384xf32>
    %30 = tpu.matmul %28, %29, %cst_13 {dimension_numbers = #tpu.dot_dimension_numbers<[1], [0], [0], [1], [0, 0, 1, 1], [], []>} : vector<16x128xbf16>, vector<128x384xbf16>, vector<16x384xf32> -> vector<16x384xf32>
    %c0_14 = arith.constant 0 : index
    %c0_15 = arith.constant 0 : index
    %31 = vector.load %arg5[%c0_14, %c0_15] : memref<1x384xf32, #tpu.memory_space<vmem>>, vector<1x384xf32>
    %32 = vector.broadcast %31 : vector<1x384xf32> to vector<16x384xf32>
    %33 = arith.addf %30, %32 : vector<16x384xf32>
    %34 = arith.truncf %33 : vector<16x384xf32> to vector<16x384xbf16>
    %35 = vector.extract_strided_slice %34 {offsets = [0, 0], sizes = [16, 64], strides = [1, 1]} : vector<16x384xbf16> to vector<16x64xbf16>
    %36 = vector.extract_strided_slice %34 {offsets = [0, 128], sizes = [16, 64], strides = [1, 1]} : vector<16x384xbf16> to vector<16x64xbf16>
    %37 = vector.extract_strided_slice %34 {offsets = [0, 256], sizes = [16, 64], strides = [1, 1]} : vector<16x384xbf16> to vector<16x64xbf16>
    %cst_16 = arith.constant dense<0.000000e+00> : vector<16x16xf32>
    %38 = tpu.matmul %35, %36, %cst_16 {dimension_numbers = #tpu.dot_dimension_numbers<[1], [1], [0], [0], [0, 0, 1, 0], [], []>} : vector<16x64xbf16>, vector<16x64xbf16>, vector<16x16xf32> -> vector<16x16xf32>
    %39 = arith.addf %38, %1 : vector<16x16xf32>
    %cst_17 = arith.constant dense<0xFF800000> : vector<16xf32>
    %40 = vector.multi_reduction <maximumf>, %39, %cst_17 [1] : vector<16x16xf32> to vector<16xf32>
    %41 = vector.shape_cast %40 : vector<16xf32> to vector<16x1xf32>
    %42 = vector.broadcast %41 : vector<16x1xf32> to vector<16x16xf32>
    %43 = arith.subf %39, %42 : vector<16x16xf32>
    %44 = math.exp %43 : vector<16x16xf32>
    %cst_18 = arith.constant dense<0.000000e+00> : vector<16xf32>
    %45 = vector.multi_reduction <add>, %44, %cst_18 [1] : vector<16x16xf32> to vector<16xf32>
    %46 = vector.shape_cast %45 : vector<16xf32> to vector<16x1xf32>
    %47 = tpu.reciprocal %46 {approx = true} : vector<16x1xf32> -> vector<16x1xf32>
    %48 = vector.broadcast %47 : vector<16x1xf32> to vector<16x16xf32>
    %49 = arith.mulf %44, %48 : vector<16x16xf32>
    %50 = arith.truncf %49 : vector<16x16xf32> to vector<16x16xbf16>
    %cst_19 = arith.constant dense<0.000000e+00> : vector<16x64xf32>
    %51 = tpu.matmul %50, %37, %cst_19 {dimension_numbers = #tpu.dot_dimension_numbers<[1], [0], [0], [1], [0, 0, 1, 1], [], []>} : vector<16x16xbf16>, vector<16x64xbf16>, vector<16x64xf32> -> vector<16x64xf32>
    %52 = vector.extract_strided_slice %34 {offsets = [0, 64], sizes = [16, 64], strides = [1, 1]} : vector<16x384xbf16> to vector<16x64xbf16>
    %53 = vector.extract_strided_slice %34 {offsets = [0, 192], sizes = [16, 64], strides = [1, 1]} : vector<16x384xbf16> to vector<16x64xbf16>
    %54 = vector.extract_strided_slice %34 {offsets = [0, 320], sizes = [16, 64], strides = [1, 1]} : vector<16x384xbf16> to vector<16x64xbf16>
    %cst_20 = arith.constant dense<0.000000e+00> : vector<16x16xf32>
    %55 = tpu.matmul %52, %53, %cst_20 {dimension_numbers = #tpu.dot_dimension_numbers<[1], [1], [0], [0], [0, 0, 1, 0], [], []>} : vector<16x64xbf16>, vector<16x64xbf16>, vector<16x16xf32> -> vector<16x16xf32>
    %56 = arith.addf %55, %1 : vector<16x16xf32>
    %cst_21 = arith.constant dense<0xFF800000> : vector<16xf32>
    %57 = vector.multi_reduction <maximumf>, %56, %cst_21 [1] : vector<16x16xf32> to vector<16xf32>
    %58 = vector.shape_cast %57 : vector<16xf32> to vector<16x1xf32>
    %59 = vector.broadcast %58 : vector<16x1xf32> to vector<16x16xf32>
    %60 = arith.subf %56, %59 : vector<16x16xf32>
    %61 = math.exp %60 : vector<16x16xf32>
    %cst_22 = arith.constant dense<0.000000e+00> : vector<16xf32>
    %62 = vector.multi_reduction <add>, %61, %cst_22 [1] : vector<16x16xf32> to vector<16xf32>
    %63 = vector.shape_cast %62 : vector<16xf32> to vector<16x1xf32>
    %64 = tpu.reciprocal %63 {approx = true} : vector<16x1xf32> -> vector<16x1xf32>
    %65 = vector.broadcast %64 : vector<16x1xf32> to vector<16x16xf32>
    %66 = arith.mulf %61, %65 : vector<16x16xf32>
    %67 = arith.truncf %66 : vector<16x16xf32> to vector<16x16xbf16>
    %cst_23 = arith.constant dense<0.000000e+00> : vector<16x64xf32>
    %68 = tpu.matmul %67, %54, %cst_23 {dimension_numbers = #tpu.dot_dimension_numbers<[1], [0], [0], [1], [0, 0, 1, 1], [], []>} : vector<16x16xbf16>, vector<16x64xbf16>, vector<16x64xf32> -> vector<16x64xf32>
    %69 = tpu.concatenate %51, %68 in 1 : vector<16x64xf32>, vector<16x64xf32> -> vector<16x128xf32>
    %70 = arith.truncf %69 : vector<16x128xf32> to vector<16x128xbf16>
    %c0_24 = arith.constant 0 : index
    %c0_25 = arith.constant 0 : index
    %71 = vector.load %arg6[%c0_24, %c0_25] : memref<128x128xbf16, #tpu.memory_space<vmem>>, vector<128x128xbf16>
    %cst_26 = arith.constant dense<0.000000e+00> : vector<16x128xf32>
    %72 = tpu.matmul %70, %71, %cst_26 {dimension_numbers = #tpu.dot_dimension_numbers<[1], [0], [0], [1], [0, 0, 1, 1], [], []>} : vector<16x128xbf16>, vector<128x128xbf16>, vector<16x128xf32> -> vector<16x128xf32>
    %c0_27 = arith.constant 0 : index
    %c0_28 = arith.constant 0 : index
    %73 = vector.load %arg7[%c0_27, %c0_28] : memref<1x128xf32, #tpu.memory_space<vmem>>, vector<1x128xf32>
    %74 = vector.broadcast %73 : vector<1x128xf32> to vector<16x128xf32>
    %75 = arith.addf %72, %74 : vector<16x128xf32>
    %76 = arith.addf %27, %75 : vector<16x128xf32>
    %c0_29 = arith.constant 0 : index
    %c0_30 = arith.constant 0 : index
    %77 = vector.load %arg8[%c0_29, %c0_30] : memref<1x128xf32, #tpu.memory_space<vmem>>, vector<1x128xf32>
    %c0_31 = arith.constant 0 : index
    %c0_32 = arith.constant 0 : index
    %78 = vector.load %arg9[%c0_31, %c0_32] : memref<1x128xf32, #tpu.memory_space<vmem>>, vector<1x128xf32>
    %cst_33 = arith.constant dense<0.000000e+00> : vector<16xf32>
    %79 = vector.multi_reduction <add>, %76, %cst_33 [1] : vector<16x128xf32> to vector<16xf32>
    %80 = vector.shape_cast %79 : vector<16xf32> to vector<16x1xf32>
    %cst_34 = arith.constant 1.280000e+02 : f32
    %81 = vector.broadcast %cst_34 : f32 to vector<16x1xf32>
    %82 = arith.divf %80, %81 : vector<16x1xf32>
    %83 = vector.broadcast %82 : vector<16x1xf32> to vector<16x128xf32>
    %84 = arith.subf %76, %83 : vector<16x128xf32>
    %85 = vector.broadcast %82 : vector<16x1xf32> to vector<16x128xf32>
    %86 = arith.subf %76, %85 : vector<16x128xf32>
    %87 = arith.mulf %84, %86 : vector<16x128xf32>
    %cst_35 = arith.constant dense<0.000000e+00> : vector<16xf32>
    %88 = vector.multi_reduction <add>, %87, %cst_35 [1] : vector<16x128xf32> to vector<16xf32>
    %89 = vector.shape_cast %88 : vector<16xf32> to vector<16x1xf32>
    %cst_36 = arith.constant 1.280000e+02 : f32
    %90 = vector.broadcast %cst_36 : f32 to vector<16x1xf32>
    %91 = arith.divf %89, %90 : vector<16x1xf32>
    %92 = vector.broadcast %82 : vector<16x1xf32> to vector<16x128xf32>
    %93 = arith.subf %76, %92 : vector<16x128xf32>
    %cst_37 = arith.constant 9.99999974E-6 : f32
    %94 = vector.broadcast %cst_37 : f32 to vector<16x1xf32>
    %95 = arith.addf %91, %94 : vector<16x1xf32>
    %96 = math.rsqrt %95 : vector<16x1xf32>
    %97 = vector.broadcast %96 : vector<16x1xf32> to vector<16x128xf32>
    %98 = arith.mulf %93, %97 : vector<16x128xf32>
    %99 = vector.broadcast %77 : vector<1x128xf32> to vector<16x128xf32>
    %100 = arith.mulf %98, %99 : vector<16x128xf32>
    %101 = vector.broadcast %78 : vector<1x128xf32> to vector<16x128xf32>
    %102 = arith.addf %100, %101 : vector<16x128xf32>
    %103 = arith.truncf %102 : vector<16x128xf32> to vector<16x128xbf16>
    %c0_38 = arith.constant 0 : index
    %c0_39 = arith.constant 0 : index
    %104 = vector.load %arg10[%c0_38, %c0_39] : memref<128x256xbf16, #tpu.memory_space<vmem>>, vector<128x256xbf16>
    %cst_40 = arith.constant dense<0.000000e+00> : vector<16x256xf32>
    %105 = tpu.matmul %103, %104, %cst_40 {dimension_numbers = #tpu.dot_dimension_numbers<[1], [0], [0], [1], [0, 0, 1, 1], [], []>} : vector<16x128xbf16>, vector<128x256xbf16>, vector<16x256xf32> -> vector<16x256xf32>
    %c0_41 = arith.constant 0 : index
    %c0_42 = arith.constant 0 : index
    %106 = vector.load %arg11[%c0_41, %c0_42] : memref<1x256xf32, #tpu.memory_space<vmem>>, vector<1x256xf32>
    %107 = vector.broadcast %106 : vector<1x256xf32> to vector<16x256xf32>
    %108 = arith.addf %105, %107 : vector<16x256xf32>
    %109 = arith.mulf %108, %108 : vector<16x256xf32>
    %110 = arith.mulf %108, %109 : vector<16x256xf32>
    %cst_43 = arith.constant 4.471500e-02 : f32
    %111 = vector.broadcast %cst_43 : f32 to vector<16x256xf32>
    %112 = arith.mulf %111, %110 : vector<16x256xf32>
    %113 = arith.addf %108, %112 : vector<16x256xf32>
    %cst_44 = arith.constant 0.797884583 : f32
    %114 = vector.broadcast %cst_44 : f32 to vector<16x256xf32>
    %115 = arith.mulf %114, %113 : vector<16x256xf32>
    %116 = math.tanh %115 : vector<16x256xf32>
    %cst_45 = arith.constant 1.000000e+00 : f32
    %117 = vector.broadcast %cst_45 : f32 to vector<16x256xf32>
    %118 = arith.addf %117, %116 : vector<16x256xf32>
    %cst_46 = arith.constant 5.000000e-01 : f32
    %119 = vector.broadcast %cst_46 : f32 to vector<16x256xf32>
    %120 = arith.mulf %119, %118 : vector<16x256xf32>
    %121 = arith.mulf %108, %120 : vector<16x256xf32>
    %122 = arith.truncf %121 : vector<16x256xf32> to vector<16x256xbf16>
    %c0_47 = arith.constant 0 : index
    %c0_48 = arith.constant 0 : index
    %123 = vector.load %arg12[%c0_47, %c0_48] : memref<256x128xbf16, #tpu.memory_space<vmem>>, vector<256x128xbf16>
    %cst_49 = arith.constant dense<0.000000e+00> : vector<16x128xf32>
    %124 = tpu.matmul %122, %123, %cst_49 {dimension_numbers = #tpu.dot_dimension_numbers<[1], [0], [0], [1], [0, 0, 1, 1], [], []>} : vector<16x256xbf16>, vector<256x128xbf16>, vector<16x128xf32> -> vector<16x128xf32>
    %c0_50 = arith.constant 0 : index
    %c0_51 = arith.constant 0 : index
    %125 = vector.load %arg13[%c0_50, %c0_51] : memref<1x128xf32, #tpu.memory_space<vmem>>, vector<1x128xf32>
    %126 = vector.broadcast %125 : vector<1x128xf32> to vector<16x128xf32>
    %127 = arith.addf %124, %126 : vector<16x128xf32>
    %128 = arith.addf %102, %127 : vector<16x128xf32>
    %c0_52 = arith.constant 0 : index
    %c0_53 = arith.constant 0 : index
    %129 = vector.load %arg14[%c0_52, %c0_53] : memref<1x128xf32, #tpu.memory_space<vmem>>, vector<1x128xf32>
    %c0_54 = arith.constant 0 : index
    %c0_55 = arith.constant 0 : index
    %130 = vector.load %arg15[%c0_54, %c0_55] : memref<1x128xf32, #tpu.memory_space<vmem>>, vector<1x128xf32>
    %cst_56 = arith.constant dense<0.000000e+00> : vector<16xf32>
    %131 = vector.multi_reduction <add>, %128, %cst_56 [1] : vector<16x128xf32> to vector<16xf32>
    %132 = vector.shape_cast %131 : vector<16xf32> to vector<16x1xf32>
    %cst_57 = arith.constant 1.280000e+02 : f32
    %133 = vector.broadcast %cst_57 : f32 to vector<16x1xf32>
    %134 = arith.divf %132, %133 : vector<16x1xf32>
    %135 = vector.broadcast %134 : vector<16x1xf32> to vector<16x128xf32>
    %136 = arith.subf %128, %135 : vector<16x128xf32>
    %137 = vector.broadcast %134 : vector<16x1xf32> to vector<16x128xf32>
    %138 = arith.subf %128, %137 : vector<16x128xf32>
    %139 = arith.mulf %136, %138 : vector<16x128xf32>
    %cst_58 = arith.constant dense<0.000000e+00> : vector<16xf32>
    %140 = vector.multi_reduction <add>, %139, %cst_58 [1] : vector<16x128xf32> to vector<16xf32>
    %141 = vector.shape_cast %140 : vector<16xf32> to vector<16x1xf32>
    %cst_59 = arith.constant 1.280000e+02 : f32
    %142 = vector.broadcast %cst_59 : f32 to vector<16x1xf32>
    %143 = arith.divf %141, %142 : vector<16x1xf32>
    %144 = vector.broadcast %134 : vector<16x1xf32> to vector<16x128xf32>
    %145 = arith.subf %128, %144 : vector<16x128xf32>
    %cst_60 = arith.constant 9.99999974E-6 : f32
    %146 = vector.broadcast %cst_60 : f32 to vector<16x1xf32>
    %147 = arith.addf %143, %146 : vector<16x1xf32>
    %148 = math.rsqrt %147 : vector<16x1xf32>
    %149 = vector.broadcast %148 : vector<16x1xf32> to vector<16x128xf32>
    %150 = arith.mulf %145, %149 : vector<16x128xf32>
    %151 = vector.broadcast %129 : vector<1x128xf32> to vector<16x128xf32>
    %152 = arith.mulf %150, %151 : vector<16x128xf32>
    %153 = vector.broadcast %130 : vector<1x128xf32> to vector<16x128xf32>
    %154 = arith.addf %152, %153 : vector<16x128xf32>
    %155 = arith.truncf %154 : vector<16x128xf32> to vector<16x128xbf16>
    %c0_61 = arith.constant 0 : index
    %c0_62 = arith.constant 0 : index
    %156 = vector.load %arg16[%c0_61, %c0_62] : memref<128x128xbf16, #tpu.memory_space<vmem>>, vector<128x128xbf16>
    %cst_63 = arith.constant dense<0.000000e+00> : vector<16x128xf32>
    %157 = tpu.matmul %155, %156, %cst_63 {dimension_numbers = #tpu.dot_dimension_numbers<[1], [0], [0], [1], [0, 0, 1, 1], [], []>} : vector<16x128xbf16>, vector<128x128xbf16>, vector<16x128xf32> -> vector<16x128xf32>
    %c0_64 = arith.constant 0 : index
    %c0_65 = arith.constant 0 : index
    %158 = vector.load %arg17[%c0_64, %c0_65] : memref<1x128xf32, #tpu.memory_space<vmem>>, vector<1x128xf32>
    %159 = vector.broadcast %158 : vector<1x128xf32> to vector<16x128xf32>
    %160 = arith.addf %157, %159 : vector<16x128xf32>
    %161 = math.tanh %160 : vector<16x128xf32>
    %c0_66 = arith.constant 0 : index
    %c0_67 = arith.constant 0 : index
    %162 = vector.load %arg18[%c0_66, %c0_67] : memref<1x128xf32, #tpu.memory_space<vmem>>, vector<1x128xf32>
    %163 = vector.broadcast %162 : vector<1x128xf32> to vector<16x128xf32>
    %164 = arith.mulf %161, %163 : vector<16x128xf32>
    %cst_68 = arith.constant dense<0.000000e+00> : vector<16xf32>
    %165 = vector.multi_reduction <add>, %164, %cst_68 [1] : vector<16x128xf32> to vector<16xf32>
    %166 = vector.shape_cast %165 : vector<16xf32> to vector<16x1xf32>
    %c0_69 = arith.constant 0 : index
    %c0_70 = arith.constant 0 : index
    %167 = vector.load %arg19[%c0_69, %c0_70] : memref<1x1xf32, #tpu.memory_space<vmem>>, vector<1x1xf32>
    %168 = vector.broadcast %167 : vector<1x1xf32> to vector<16x1xf32>
    %169 = arith.addf %166, %168 : vector<16x1xf32>
    %170 = vector.shape_cast %169 : vector<16x1xf32> to vector<16x1xf32>
    %171 = vector.broadcast %170 : vector<16x1xf32> to vector<16x128xf32>
    %c0_71 = arith.constant 0 : index
    %c0_72 = arith.constant 0 : index
    %172 = vector.load %arg20[%c0_71, %c0_72] : memref<16x128xf32, #tpu.memory_space<vmem>>, vector<16x128xf32>
    tpu.vector_store %arg20[%c0_71, %c0_72], %171 {strides = array<i32>} : memref<16x128xf32, #tpu.memory_space<vmem>>, vector<16x128xf32>,
    return
  }
}

</mosaic_0001>

<llo_original>
// kernel: bert_arch_forward.1
$region0: #{bert_arch_forward.1}
  #allocation0 [shape = 'u32[]', space=smem, size = 0x4, offset = 0x4, fixed_abs, tag = 'smem constant byte address 0x4 - core index']
  #allocation1 [shape = 'u32[72,128]{1,0:T(1,128)}', space=vmem, size = 0x9000, scoped, tag = 'internal scratch']
  #allocation2 [shape = 'f32[1,1]{1,0:T(1,128)S(1)}', space=vmem, size = 0x200, scoped, tag = 'scoped memory for bert_arch_forward.1']
  %s0 = inlined_call_operand.vmem [shape: f32[16,16], index: 0, kind: input, shape index: {}]
  %s1 = inlined_call_operand.vmem [shape: f32[16,128], index: 1, kind: input, shape index: {}]
  %s2 = inlined_call_operand.vmem [shape: f32[1,128], index: 2, kind: input, shape index: {}]
  %s3 = inlined_call_operand.vmem [shape: f32[1,128], index: 3, kind: input, shape index: {}]
  %s4 = inlined_call_operand.vmem [shape: bf16[128,384], index: 4, kind: input, shape index: {}]
  %s5 = inlined_call_operand.vmem [shape: f32[1,384], index: 5, kind: input, shape index: {}]
  %s6 = inlined_call_operand.vmem [shape: bf16[128,128], index: 6, kind: input, shape index: {}]
  %s7 = inlined_call_operand.vmem [shape: f32[1,128], index: 7, kind: input, shape index: {}]
  %s8 = inlined_call_operand.vmem [shape: f32[1,128], index: 8, kind: input, shape index: {}]
  %s9 = inlined_call_operand.vmem [shape: f32[1,128], index: 9, kind: input, shape index: {}]
  %s10 = inlined_call_operand.vmem [shape: bf16[128,256], index: 10, kind: input, shape index: {}]
  %s11 = inlined_call_operand.vmem [shape: f32[1,256], index: 11, kind: input, shape index: {}]
  %s12 = inlined_call_operand.vmem [shape: bf16[256,128], index: 12, kind: input, shape index: {}]
  %s13 = inlined_call_operand.vmem [shape: f32[1,128], index: 13, kind: input, shape index: {}]
  %s14 = inlined_call_operand.vmem [shape: f32[1,128], index: 14, kind: input, shape index: {}]
  %s15 = inlined_call_operand.vmem [shape: f32[1,128], index: 15, kind: input, shape index: {}]
  %s16 = inlined_call_operand.vmem [shape: bf16[128,128], index: 16, kind: input, shape index: {}]
  %s17 = inlined_call_operand.vmem [shape: f32[1,128], index: 17, kind: input, shape index: {}]
  %s18 = inlined_call_operand.vmem [shape: f32[1,128], index: 18, kind: input, shape index: {}]
  %s19 = inlined_call_operand.<no memory space> [shape: f32[1,1], index: 19, kind: input, shape index: {}]
  %s20 = inlined_call_operand.vmem [shape: f32[16,128], index: 20, kind: output, shape index: {}]
  %s21 = sld [smem:[#allocation0]]
  $region90: #{bert_arch_forward.1} parent=0
    _
  %s23 = ssub.s32 1, %s21
  %s24 = scalar_select 0, %s23, %s21
  %v25 = vstv %s19
  %26 = vst [vmem:[#allocation2] sm:$0x1] %v25
  // Predicated region
  $region2: #{bert_arch_forward.1} parent=0 // pred_check
    _
  $region3: #{bert_arch_forward.1} parent=0 // pred_check_branch
    %28 = sbr.rel (0) target = $region5
  $region4: #{bert_arch_forward.1} parent=0 // pred_region
    _
  $region5: #{bert_arch_forward.1} parent=0 // pred_fallthru
    _
  // Predicated region
  $region6: #{bert_arch_forward.1} parent=0 // pred_check
    _
  $region7: #{bert_arch_forward.1} parent=0 // pred_check_branch
    %30 = sbr.rel (0) target = $region9
  $region8: #{bert_arch_forward.1} parent=0 // pred_region
    _
  $region9: #{bert_arch_forward.1} parent=0 // pred_fallthru
    _
  // Predicated region
  $region10: #{bert_arch_forward.1} parent=0 // pred_check
    _
  $region11: #{bert_arch_forward.1} parent=0 // pred_check_branch
    %32 = sbr.rel (0) target = $region13
  $region12: #{bert_arch_forward.1} parent=0 // pred_region
    _
  $region13: #{bert_arch_forward.1} parent=0 // pred_fallthru
    _
  // Predicated region
  $region14: #{bert_arch_forward.1} parent=0 // pred_check
    _
  $region15: #{bert_arch_forward.1} parent=0 // pred_check_branch
    %34 = sbr.rel (0) target = $region17
  $region16: #{bert_arch_forward.1} parent=0 // pred_region
    _
  $region17: #{bert_arch_forward.1} parent=0 // pred_fallthru
    _
  // Predicated region
  $region18: #{bert_arch_forward.1} parent=0 // pred_check
    _
  $region19: #{bert_arch_forward.1} parent=0 // pred_check_branch
    %36 = sbr.rel (0) target = $region21
  $region20: #{bert_arch_forward.1} parent=0 // pred_region
    _
  $region21: #{bert_arch_forward.1} parent=0 // pred_fallthru
    _
  // Predicated region
  $region22: #{bert_arch_forward.1} parent=0 // pred_check
    _
  $region23: #{bert_arch_forward.1} parent=0 // pred_check_branch
    %38 = sbr.rel (0) target = $region25
  $region24: #{bert_arch_forward.1} parent=0 // pred_region
    _
  $region25: #{bert_arch_forward.1} parent=0 // pred_fallthru
    _
  // Predicated region
  $region26: #{bert_arch_forward.1} parent=0 // pred_check
    _
  $region27: #{bert_arch_forward.1} parent=0 // pred_check_branch
    %40 = sbr.rel (0) target = $region29
  $region28: #{bert_arch_forward.1} parent=0 // pred_region
    _
  $region29: #{bert_arch_forward.1} parent=0 // pred_fallthru
    _
  // Predicated region
  $region30: #{bert_arch_forward.1} parent=0 // pred_check
    _
  $region31: #{bert_arch_forward.1} parent=0 // pred_check_branch
    %42 = sbr.rel (0) target = $region33
  $region32: #{bert_arch_forward.1} parent=0 // pred_region
    _
  $region33: #{bert_arch_forward.1} parent=0 // pred_fallthru
    _
  // Predicated region
  $region34: #{bert_arch_forward.1} parent=0 // pred_check
    _
  $region35: #{bert_arch_forward.1} parent=0 // pred_check_branch
    %44 = sbr.rel (0) target = $region37
  $region36: #{bert_arch_forward.1} parent=0 // pred_region
    _
  $region37: #{bert_arch_forward.1} parent=0 // pred_fallthru
    _
  // Predicated region
  $region38: #{bert_arch_forward.1} parent=0 // pred_check
    _
  $region39: #{bert_arch_forward.1} parent=0 // pred_check_branch
    %46 = sbr.rel (0) target = $region41
  $region40: #{bert_arch_forward.1} parent=0 // pred_region
    _
  $region41: #{bert_arch_forward.1} parent=0 // pred_fallthru
    _
  // Predicated region
  $region42: #{bert_arch_forward.1} parent=0 // pred_check
    _
  $region43: #{bert_arch_forward.1} parent=0 // pred_check_branch
    %48 = sbr.rel (0) target = $region45
  $region44: #{bert_arch_forward.1} parent=0 // pred_region
    _
  $region45: #{bert_arch_forward.1} parent=0 // pred_fallthru
    _
  // Predicated region
  $region46: #{bert_arch_forward.1} parent=0 // pred_check
    _
  $region47: #{bert_arch_forward.1} parent=0 // pred_check_branch
    %50 = sbr.rel (0) target = $region49
  $region48: #{bert_arch_forward.1} parent=0 // pred_region
    _
  $region49: #{bert_arch_forward.1} parent=0 // pred_fallthru
    _
  // Predicated region
  $region50: #{bert_arch_forward.1} parent=0 // pred_check
    _
  $region51: #{bert_arch_forward.1} parent=0 // pred_check_branch
    %52 = sbr.rel (0) target = $region53
  $region52: #{bert_arch_forward.1} parent=0 // pred_region
    _
  $region53: #{bert_arch_forward.1} parent=0 // pred_fallthru
    _
  // Predicated region
  $region54: #{bert_arch_forward.1} parent=0 // pred_check
    _
  $region55: #{bert_arch_forward.1} parent=0 // pred_check_branch
    %54 = sbr.rel (0) target = $region57
  $region56: #{bert_arch_forward.1} parent=0 // pred_region
    _
  $region57: #{bert_arch_forward.1} parent=0 // pred_fallthru
    _
  // Predicated region
  $region58: #{bert_arch_forward.1} parent=0 // pred_check
    _
  $region59: #{bert_arch_forward.1} parent=0 // pred_check_branch
    %56 = sbr.rel (0) target = $region61
  $region60: #{bert_arch_forward.1} parent=0 // pred_region
    _
  $region61: #{bert_arch_forward.1} parent=0 // pred_fallthru
    _
  // Predicated region
  $region62: #{bert_arch_forward.1} parent=0 // pred_check
    _
  $region63: #{bert_arch_forward.1} parent=0 // pred_check_branch
    %58 = sbr.rel (0) target = $region65
  $region64: #{bert_arch_forward.1} parent=0 // pred_region
    _
  $region65: #{bert_arch_forward.1} parent=0 // pred_fallthru
    _
  // Predicated region
  $region66: #{bert_arch_forward.1} parent=0 // pred_check
    _
  $region67: #{bert_arch_forward.1} parent=0 // pred_check_branch
    %60 = sbr.rel (0) target = $region69
  $region68: #{bert_arch_forward.1} parent=0 // pred_region
    _
  $region69: #{bert_arch_forward.1} parent=0 // pred_fallthru
    _
  // Predicated region
  $region70: #{bert_arch_forward.1} parent=0 // pred_check
    _
  $region71: #{bert_arch_forward.1} parent=0 // pred_check_branch
    %62 = sbr.rel (0) target = $region73
  $region72: #{bert_arch_forward.1} parent=0 // pred_region
    _
  $region73: #{bert_arch_forward.1} parent=0 // pred_fallthru
    _
  // Predicated region
  $region74: #{bert_arch_forward.1} parent=0 // pred_check
    _
  $region75: #{bert_arch_forward.1} parent=0 // pred_check_branch
    %64 = sbr.rel (0) target = $region77
  $region76: #{bert_arch_forward.1} parent=0 // pred_region
    _
  $region77: #{bert_arch_forward.1} parent=0 // pred_fallthru
    _
  // Predicated region
  $region78: #{bert_arch_forward.1} parent=0 // pred_check
    _
  $region79: #{bert_arch_forward.1} parent=0 // pred_check_branch
    %66 = sbr.rel (0) target = $region81
  $region80: #{bert_arch_forward.1} parent=0 // pred_region
    _
  $region81: #{bert_arch_forward.1} parent=0 // pred_fallthru
    _
  %v68 = vld [vmem:[%s1] sm:$0xff]
  %v69 = vld [vmem:[%s1 + $0x8] sm:$0xff]
  %v70 = vld [vmem:[%s0] sm:$0xff]
  %v71 = vld [vmem:[%s0 + $0x8] sm:$0xff]
  %v72 = vld [vmem:[%s2] sm:$0x1]
  %v73 = vld [vmem:[%s3] sm:$0x1]
  %74 = vadd.xlane.f32.xlu0 %v68
  %v75 = vpop.xlane.xlu0 %74
  %76 = vadd.xlane.f32.xlu0 %v69
  %v77 = vpop.xlane.xlu0 %76
  %v78 = vrcp.pop 128.0
  %v79 = vmul.f32 128.0, %v78
  %v80 = vsub.f32 1.0, %v79
  %v81 = vmul.f32 %v78, %v80
  %v82 = vadd.f32 %v78, %v81
  %vm83 = vweird.f32 %v78
  %v84 = vsel %vm83, %v78, %v82
  %v85 = vmul.f32 %v75, %v84
  %v86 = vmul.f32 %v77, %v84
  %v87 = vsub.f32 %v68, %v85
  %v88 = vsub.f32 %v69, %v86
  %v89 = vmul.f32 %v87, %v87
  %v90 = vmul.f32 %v88, %v88
  %91 = vadd.xlane.f32.xlu0 %v89
  %v92 = vpop.xlane.xlu0 %91
  %93 = vadd.xlane.f32.xlu0 %v90
  %v94 = vpop.xlane.xlu0 %93
  %v95 = vmul.f32 %v92, %v84
  %v96 = vmul.f32 %v94, %v84
  %v97 = vadd.f32 %v95, 1e-05
  %v98 = vadd.f32 %v96, 1e-05
  %v99 = vrsqrt.pop %v97
  %v100 = vmul.f32 %v99, %v97
  %v101 = vmul.f32 %v100, %v99
  %v102 = vmul.f32 0.5, %v101
  %v103 = vsub.f32 1.5, %v102
  %v104 = vmul.f32 %v99, %v103
  %vm105 = vweird.f32 %v97
  %vm106 = vweird.f32 %v99
  %vm107 = vmor %vm105, %vm106
  %v108 = vsel %vm107, %v99, %v104
  %v109 = vrsqrt.pop %v98
  %v110 = vmul.f32 %v109, %v98
  %v111 = vmul.f32 %v110, %v109
  %v112 = vmul.f32 0.5, %v111
  %v113 = vsub.f32 1.5, %v112
  %v114 = vmul.f32 %v109, %v113
  %vm115 = vweird.f32 %v98
  %vm116 = vweird.f32 %v109
  %vm117 = vmor %vm115, %vm116
  %v118 = vsel %vm117, %v109, %v114
  %v119 = vmul.f32 %v87, %v108
  %v120 = vmul.f32 %v88, %v118
  %v122 = vperm.slane %v72, 0
  %v124 = vmul.f32 %v119, %v122
  %v125 = vmul.f32 %v120, %v122
  %v127 = vperm.slane %v73, 0
  %v129 = vadd.f32 %v124, %v127
  %v130 = vadd.f32 %v125, %v127
  %v131 = vpack.c.bf16 %v130, %v129
  %v132 = vld [vmem:[%s4] sm:$0xff]
  %v133 = vld [vmem:[%s4 + $0x8] sm:$0xf]
  %v134 = vld [vmem:[%s4 + $0xc] sm:$0xff]
  %v135 = vld [vmem:[%s4 + $0x14] sm:$0xf]
  %v136 = vld [vmem:[%s4 + $0x18] sm:$0xff]
  %v137 = vld [vmem:[%s4 + $0x20] sm:$0xf]
  %v138 = vld [vmem:[%s4 + $0x24] sm:$0xff]
  %v139 = vld [vmem:[%s4 + $0x2c] sm:$0xf]
  %v140 = vld [vmem:[%s4 + $0x30] sm:$0xff]
  %v141 = vld [vmem:[%s4 + $0x38] sm:$0xf]
  %v142 = vld [vmem:[%s4 + $0x3c] sm:$0xff]
  %v143 = vld [vmem:[%s4 + $0x44] sm:$0xf]
  %v144 = vld [vmem:[%s4 + $0x48] sm:$0xff]
  %v145 = vld [vmem:[%s4 + $0x50] sm:$0xf]
  %v146 = vld [vmem:[%s4 + $0x54] sm:$0xff]
  %v147 = vld [vmem:[%s4 + $0x5c] sm:$0xf]
  %v148 = vld [vmem:[%s4 + $0x60] sm:$0xff]
  %v149 = vld [vmem:[%s4 + $0x68] sm:$0xf]
  %v150 = vld [vmem:[%s4 + $0x6c] sm:$0xff]
  %v151 = vld [vmem:[%s4 + $0x74] sm:$0xf]
  %v152 = vld [vmem:[%s4 + $0x78] sm:$0xff]
  %v153 = vld [vmem:[%s4 + $0x80] sm:$0xf]
  %v154 = vld [vmem:[%s4 + $0x84] sm:$0xff]
  %v155 = vld [vmem:[%s4 + $0x8c] sm:$0xf]
  %v156 = vld [vmem:[%s4 + $0x90] sm:$0xff]
  %v157 = vld [vmem:[%s4 + $0x98] sm:$0xf]
  %v158 = vld [vmem:[%s4 + $0x9c] sm:$0xff]
  %v159 = vld [vmem:[%s4 + $0xa4] sm:$0xf]
  %v160 = vld [vmem:[%s4 + $0xa8] sm:$0xff]
  %v161 = vld [vmem:[%s4 + $0xb0] sm:$0xf]
  %v162 = vld [vmem:[%s4 + $0xb4] sm:$0xff]
  %v163 = vld [vmem:[%s4 + $0xbc] sm:$0xf]
  %v164 = vld [vmem:[%s5] sm:$0x7]
  %v166 = vperm.slane %v164, 0
  %v167 = vperm.slane %v164, 1
  %v168 = vperm.slane %v164, 2
  %v204 = vunpack.c.l.b16 %v132
  %v205 = vunpack.c.h.b16 %v132
  %v206 = vunpack.c.l.b16 %v133
  %v207 = vunpack.c.l.b16 %v134
  %v208 = vunpack.c.h.b16 %v134
  %v209 = vunpack.c.l.b16 %v135
  %v210 = vunpack.c.l.b16 %v136
  %v211 = vunpack.c.h.b16 %v136
  %v212 = vunpack.c.l.b16 %v137
  %v213 = vunpack.c.l.b16 %v138
  %v214 = vunpack.c.h.b16 %v138
  %v215 = vunpack.c.l.b16 %v139
  %v216 = vunpack.c.l.b16 %v140
  %v217 = vunpack.c.h.b16 %v140
  %v218 = vunpack.c.l.b16 %v141
  %v219 = vunpack.c.l.b16 %v142
  %v220 = vunpack.c.h.b16 %v142
  %v221 = vunpack.c.l.b16 %v143
  %v222 = vunpack.c.l.b16 %v144
  %v223 = vunpack.c.h.b16 %v144
  %v224 = vunpack.c.l.b16 %v145
  %v225 = vunpack.c.l.b16 %v146
  %v226 = vunpack.c.h.b16 %v146
  %v227 = vunpack.c.l.b16 %v147
  %v228 = vunpack.c.l.b16 %v148
  %v229 = vunpack.c.h.b16 %v148
  %v230 = vunpack.c.l.b16 %v149
  %v231 = vunpack.c.l.b16 %v150
  %v232 = vunpack.c.h.b16 %v150
  %v233 = vunpack.c.l.b16 %v151
  %v234 = vunpack.c.l.b16 %v152
  %v235 = vunpack.c.h.b16 %v152
  %v236 = vunpack.c.l.b16 %v153
  %v237 = vunpack.c.l.b16 %v154
  %v238 = vunpack.c.h.b16 %v154
  %v239 = vunpack.c.l.b16 %v155
  %v240 = vunpack.c.l.b16 %v156
  %v241 = vunpack.c.h.b16 %v156
  %v242 = vunpack.c.l.b16 %v157
  %v243 = vunpack.c.l.b16 %v158
  %v244 = vunpack.c.h.b16 %v158
  %v245 = vunpack.c.l.b16 %v159
  %v246 = vunpack.c.l.b16 %v160
  %v247 = vunpack.c.h.b16 %v160
  %v248 = vunpack.c.l.b16 %v161
  %v249 = vunpack.c.l.b16 %v162
  %v250 = vunpack.c.h.b16 %v162
  %v251 = vunpack.c.l.b16 %v163
  %v252 = vpack.c.b16 %v207, %v204
  %v253 = vpack.c.b16 %v208, %v205
  %v254 = vpack.c.b16 %v209, %v206
  %v255 = vpack.c.b16 %v213, %v210
  %v256 = vpack.c.b16 %v214, %v211
  %v257 = vpack.c.b16 %v215, %v212
  %v258 = vpack.c.b16 %v219, %v216
  %v259 = vpack.c.b16 %v220, %v217
  %v260 = vpack.c.b16 %v221, %v218
  %v261 = vpack.c.b16 %v225, %v222
  %v262 = vpack.c.b16 %v226, %v223
  %v263 = vpack.c.b16 %v227, %v224
  %v264 = vpack.c.b16 %v231, %v228
  %v265 = vpack.c.b16 %v232, %v229
  %v266 = vpack.c.b16 %v233, %v230
  %v267 = vpack.c.b16 %v237, %v234
  %v268 = vpack.c.b16 %v238, %v235
  %v269 = vpack.c.b16 %v239, %v236
  %v270 = vpack.c.b16 %v243, %v240
  %v271 = vpack.c.b16 %v244, %v241
  %v272 = vpack.c.b16 %v245, %v242
  %v273 = vpack.c.b16 %v249, %v246
  %v274 = vpack.c.b16 %v250, %v247
  %v275 = vpack.c.b16 %v251, %v248
  %300 = vmatpush.bf16.msra.mxu0 %v273
  %301 = vmatpush.bf16.msra.mxu0 %v270
  %302 = vmatpush.bf16.msra.mxu0 %v267
  %303 = vmatpush.bf16.msra.mxu0 %v264
  %304 = vmatpush.bf16.msra.mxu0 %v261
  %305 = vmatpush.bf16.msra.mxu0 %v258
  %306 = vmatpush.bf16.msra.mxu0 %v255
  %307 = vmatpush.bf16.msra.mxu0 %v252
  %308 = vmatmul.bf16.gmra.mxu0 %v131
  %v309 = vpop.f32.mrf.mxu0
  %v310 = vadd.f32 %v166, %v309
  %v311 = vpop.f32.mrf.mxu0
  %v312 = vadd.f32 %v166, %v311
  %313 = vdwg.mxu0
  %314 = vmatpush.bf16.msra.mxu0 %v274
  %315 = vmatpush.bf16.msra.mxu0 %v271
  %316 = vmatpush.bf16.msra.mxu0 %v268
  %317 = vmatpush.bf16.msra.mxu0 %v265
  %318 = vmatpush.bf16.msra.mxu0 %v262
  %319 = vmatpush.bf16.msra.mxu0 %v259
  %320 = vmatpush.bf16.msra.mxu0 %v256
  %321 = vmatpush.bf16.msra.mxu0 %v253
  %322 = vmatmul.bf16.gmra.mxu0 %v131
  %v323 = vpop.f32.mrf.mxu0
  %v324 = vadd.f32 %v167, %v323
  %v325 = vpop.f32.mrf.mxu0
  %v326 = vadd.f32 %v167, %v325
  %327 = vdwg.mxu0
  %328 = vmatpush.bf16.msra.mxu0 %v275
  %329 = vmatpush.bf16.msra.mxu0 %v272
  %330 = vmatpush.bf16.msra.mxu0 %v269
  %331 = vmatpush.bf16.msra.mxu0 %v266
  %332 = vmatpush.bf16.msra.mxu0 %v263
  %333 = vmatpush.bf16.msra.mxu0 %v260
  %334 = vmatpush.bf16.msra.mxu0 %v257
  %335 = vmatpush.bf16.msra.mxu0 %v254
  %336 = vmatmul.bf16.gmra.mxu0 %v131
  %v337 = vpop.f32.mrf.mxu0
  %v338 = vadd.f32 %v168, %v337
  %v339 = vpop.f32.mrf.mxu0
  %v340 = vadd.f32 %v168, %v339
  %341 = vdwg.mxu0
  %v342 = vpack.c.bf16 %v324, %v310
  %v343 = vpack.c.bf16 %v338, %v338
  %v344 = vpack.c.bf16 %v326, %v312
  %v345 = vpack.c.bf16 %v340, %v340
  %v348 = vunpack.c.l.b16 %v342
  %v349 = vunpack.c.l.b16 %v344
  %v350 = vpack.c.b16 %v349, %v348
  %v351 = vunpack.c.h.b16 %v342
  %v352 = vunpack.c.h.b16 %v344
  %v353 = vpack.c.b16 %v352, %v351
  %vm354 = vcmask 523264
  %v356 = vsel %vm354, %v350, 0
  %v359 = vsel %vm354, %v353, 0
  %361 = vmatpush.bf16.xpose.msra.mxu0 0
  %362 = vmatpush.bf16.xpose.msra.mxu0 0
  %363 = vmatpush.bf16.xpose.msra.mxu0 0
  %364 = vmatpush.bf16.xpose.msra.mxu0 0
  %365 = vmatpush.bf16.xpose.msra.mxu0 0
  %366 = vmatpush.bf16.xpose.msra.mxu0 0
  %367 = vmatpush.bf16.xpose.msra.mxu0 0
  %368 = vmatpush.bf16.xpose.msra.mxu0 %v359
  %369 = vmatmul.bf16.gmra.mxu0 %v356
  %v370 = vpop.f32.mrf.mxu0
  %v371 = vadd.f32 %v70, %v370
  %v372 = vpop.f32.mrf.mxu0
  %v373 = vadd.f32 %v71, %v372
  %374 = vdwg.mxu0
  %vm375 = vcmask 130048
  %v376 = vsel %vm375, %v371, -inf
  %377 = vmax.xlane.f32.xlu0 %v376
  %v378 = vpop.xlane.xlu0 %377
  %v379 = vsel %vm375, %v373, -inf
  %380 = vmax.xlane.f32.xlu0 %v379
  %v381 = vpop.xlane.xlu0 %380
  %v382 = vsub.f32 %v371, %v378
  %v383 = vsub.f32 %v373, %v381
  %v384 = vmul.f32 %v382, 1.442695
  %v385 = vpow.pop %v384
  %v386 = vmul.f32 %v383, 1.442695
  %v387 = vpow.pop %v386
  %v388 = vsel %vm375, %v385, 0.0
  %389 = vadd.xlane.f32.xlu0 %v388
  %v390 = vpop.xlane.xlu0 %389
  %v391 = vsel %vm375, %v387, 0.0
  %392 = vadd.xlane.f32.xlu0 %v391
  %v393 = vpop.xlane.xlu0 %392
  %v394 = vrcp.pop %v390
  %v395 = vrcp.pop %v393
  %v396 = vmul.f32 %v385, %v394
  %v397 = vmul.f32 %v387, %v395
  %v398 = vpack.c.bf16 %v397, %v396
  %v401 = vunpack.c.l.b16 %v343
  %v402 = vunpack.c.l.b16 %v345
  %v403 = vpack.c.b16 %v402, %v401
  %v406 = vsel %vm375, %v398, 0
  %408 = vmatpush.bf16.msra.mxu0 0
  %409 = vmatpush.bf16.msra.mxu0 0
  %410 = vmatpush.bf16.msra.mxu0 0
  %411 = vmatpush.bf16.msra.mxu0 0
  %412 = vmatpush.bf16.msra.mxu0 0
  %413 = vmatpush.bf16.msra.mxu0 0
  %414 = vmatpush.bf16.msra.mxu0 0
  %415 = vmatpush.bf16.msra.mxu0 %v403
  %416 = vmatmul.bf16.gmra.mxu0 %v406
  %v417 = vpop.f32.mrf.mxu0
  %v418 = vadd.f32 0.0, %v417
  %v419 = vpop.f32.mrf.mxu0
  %v420 = vadd.f32 0.0, %v419
  %421 = vdwg.mxu0
  %422 = vrot.lane.b32.xlu0 %v350, 64
  %v423 = vpop.permute.xlu0 %422
  %424 = vrot.lane.b32.xlu0 %v353, 64
  %v425 = vpop.permute.xlu0 %424
  %v427 = vsel %vm354, %v423, 0
  %v430 = vsel %vm354, %v425, 0
  %432 = vmatpush.bf16.xpose.msra.mxu0 0
  %433 = vmatpush.bf16.xpose.msra.mxu0 0
  %434 = vmatpush.bf16.xpose.msra.mxu0 0
  %435 = vmatpush.bf16.xpose.msra.mxu0 0
  %436 = vmatpush.bf16.xpose.msra.mxu0 0
  %437 = vmatpush.bf16.xpose.msra.mxu0 0
  %438 = vmatpush.bf16.xpose.msra.mxu0 0
  %439 = vmatpush.bf16.xpose.msra.mxu0 %v430
  %440 = vmatmul.bf16.gmra.mxu0 %v427
  %v441 = vpop.f32.mrf.mxu0
  %v442 = vadd.f32 %v70, %v441
  %v443 = vpop.f32.mrf.mxu0
  %v444 = vadd.f32 %v71, %v443
  %445 = vdwg.mxu0
  %v446 = vsel %vm375, %v442, -inf
  %447 = vmax.xlane.f32.xlu0 %v446
  %v448 = vpop.xlane.xlu0 %447
  %v449 = vsel %vm375, %v444, -inf
  %450 = vmax.xlane.f32.xlu0 %v449
  %v451 = vpop.xlane.xlu0 %450
  %v452 = vsub.f32 %v442, %v448
  %v453 = vsub.f32 %v444, %v451
  %v454 = vmul.f32 %v452, 1.442695
  %v455 = vpow.pop %v454
  %v456 = vmul.f32 %v453, 1.442695
  %v457 = vpow.pop %v456
  %v458 = vsel %vm375, %v455, 0.0
  %459 = vadd.xlane.f32.xlu0 %v458
  %v460 = vpop.xlane.xlu0 %459
  %v461 = vsel %vm375, %v457, 0.0
  %462 = vadd.xlane.f32.xlu0 %v461
  %v463 = vpop.xlane.xlu0 %462
  %v464 = vrcp.pop %v460
  %v465 = vrcp.pop %v463
  %v466 = vmul.f32 %v455, %v464
  %v467 = vmul.f32 %v457, %v465
  %v468 = vpack.c.bf16 %v467, %v466
  %469 = vrot.lane.b32.xlu0 %v403, 64
  %v470 = vpop.permute.xlu0 %469
  %v473 = vsel %vm375, %v468, 0
  %475 = vmatpush.bf16.msra.mxu0 0
  %476 = vmatpush.bf16.msra.mxu0 0
  %477 = vmatpush.bf16.msra.mxu0 0
  %478 = vmatpush.bf16.msra.mxu0 0
  %479 = vmatpush.bf16.msra.mxu0 0
  %480 = vmatpush.bf16.msra.mxu0 0
  %481 = vmatpush.bf16.msra.mxu0 0
  %482 = vmatpush.bf16.msra.mxu0 %v470
  %483 = vmatmul.bf16.gmra.mxu0 %v473
  %v484 = vpop.f32.mrf.mxu0
  %v485 = vadd.f32 0.0, %v484
  %v486 = vpop.f32.mrf.mxu0
  %v487 = vadd.f32 0.0, %v486
  %488 = vdwg.mxu0
  %491 = vrot.lane.b32.xlu0 %v485, 64
  %v492 = vpop.permute.xlu0 %491
  %493 = vrot.lane.b32.xlu0 %v487, 64
  %v494 = vpop.permute.xlu0 %493
  %v497 = vsel %vm354, %v418, %v492
  %v498 = vsel %vm354, %v420, %v494
  %v499 = vpack.c.bf16 %v498, %v497
  %v500 = vld [vmem:[%s6] sm:$0xf]
  %v501 = vld [vmem:[%s6 + $0x4] sm:$0xf]
  %v502 = vld [vmem:[%s6 + $0x8] sm:$0xf]
  %v503 = vld [vmem:[%s6 + $0xc] sm:$0xf]
  %v504 = vld [vmem:[%s6 + $0x10] sm:$0xf]
  %v505 = vld [vmem:[%s6 + $0x14] sm:$0xf]
  %v506 = vld [vmem:[%s6 + $0x18] sm:$0xf]
  %v507 = vld [vmem:[%s6 + $0x1c] sm:$0xf]
  %v508 = vld [vmem:[%s6 + $0x20] sm:$0xf]
  %v509 = vld [vmem:[%s6 + $0x24] sm:$0xf]
  %v510 = vld [vmem:[%s6 + $0x28] sm:$0xf]
  %v511 = vld [vmem:[%s6 + $0x2c] sm:$0xf]
  %v512 = vld [vmem:[%s6 + $0x30] sm:$0xf]
  %v513 = vld [vmem:[%s6 + $0x34] sm:$0xf]
  %v514 = vld [vmem:[%s6 + $0x38] sm:$0xf]
  %v515 = vld [vmem:[%s6 + $0x3c] sm:$0xf]
  %v516 = vld [vmem:[%s7] sm:$0x1]
  %v518 = vperm.slane %v516, 0
  %v536 = vunpack.c.l.b16 %v500
  %v537 = vunpack.c.l.b16 %v501
  %v538 = vunpack.c.l.b16 %v502
  %v539 = vunpack.c.l.b16 %v503
  %v540 = vunpack.c.l.b16 %v504
  %v541 = vunpack.c.l.b16 %v505
  %v542 = vunpack.c.l.b16 %v506
  %v543 = vunpack.c.l.b16 %v507
  %v544 = vunpack.c.l.b16 %v508
  %v545 = vunpack.c.l.b16 %v509
  %v546 = vunpack.c.l.b16 %v510
  %v547 = vunpack.c.l.b16 %v511
  %v548 = vunpack.c.l.b16 %v512
  %v549 = vunpack.c.l.b16 %v513
  %v550 = vunpack.c.l.b16 %v514
  %v551 = vunpack.c.l.b16 %v515
  %v552 = vpack.c.b16 %v537, %v536
  %v553 = vpack.c.b16 %v539, %v538
  %v554 = vpack.c.b16 %v541, %v540
  %v555 = vpack.c.b16 %v543, %v542
  %v556 = vpack.c.b16 %v545, %v544
  %v557 = vpack.c.b16 %v547, %v546
  %v558 = vpack.c.b16 %v549, %v548
  %v559 = vpack.c.b16 %v551, %v550
  %568 = vmatpush.bf16.msra.mxu0 %v559
  %569 = vmatpush.bf16.msra.mxu0 %v558
  %570 = vmatpush.bf16.msra.mxu0 %v557
  %571 = vmatpush.bf16.msra.mxu0 %v556
  %572 = vmatpush.bf16.msra.mxu0 %v555
  %573 = vmatpush.bf16.msra.mxu0 %v554
  %574 = vmatpush.bf16.msra.mxu0 %v553
  %575 = vmatpush.bf16.msra.mxu0 %v552
  %576 = vmatmul.bf16.gmra.mxu0 %v499
  %v577 = vpop.f32.mrf.mxu0
  %v578 = vadd.f32 %v518, %v577
  %v579 = vpop.f32.mrf.mxu0
  %v580 = vadd.f32 %v518, %v579
  %581 = vdwg.mxu0
  %v582 = vadd.f32 %v129, %v578
  %v583 = vadd.f32 %v130, %v580
  %v584 = vld [vmem:[%s8] sm:$0x1]
  %v585 = vld [vmem:[%s9] sm:$0x1]
  %586 = vadd.xlane.f32.xlu0 %v582
  %v587 = vpop.xlane.xlu0 %586
  %588 = vadd.xlane.f32.xlu0 %v583
  %v589 = vpop.xlane.xlu0 %588
  %v590 = vmul.f32 %v587, %v84
  %v591 = vmul.f32 %v589, %v84
  %v592 = vsub.f32 %v582, %v590
  %v593 = vsub.f32 %v583, %v591
  %v594 = vmul.f32 %v592, %v592
  %v595 = vmul.f32 %v593, %v593
  %596 = vadd.xlane.f32.xlu0 %v594
  %v597 = vpop.xlane.xlu0 %596
  %598 = vadd.xlane.f32.xlu0 %v595
  %v599 = vpop.xlane.xlu0 %598
  %v600 = vmul.f32 %v597, %v84
  %v601 = vmul.f32 %v599, %v84
  %v602 = vadd.f32 %v600, 1e-05
  %v603 = vadd.f32 %v601, 1e-05
  %v604 = vrsqrt.pop %v602
  %v605 = vmul.f32 %v604, %v602
  %v606 = vmul.f32 %v605, %v604
  %v607 = vmul.f32 0.5, %v606
  %v608 = vsub.f32 1.5, %v607
  %v609 = vmul.f32 %v604, %v608
  %vm610 = vweird.f32 %v602
  %vm611 = vweird.f32 %v604
  %vm612 = vmor %vm610, %vm611
  %v613 = vsel %vm612, %v604, %v609
  %v614 = vrsqrt.pop %v603
  %v615 = vmul.f32 %v614, %v603
  %v616 = vmul.f32 %v615, %v614
  %v617 = vmul.f32 0.5, %v616
  %v618 = vsub.f32 1.5, %v617
  %v619 = vmul.f32 %v614, %v618
  %vm620 = vweird.f32 %v603
  %vm621 = vweird.f32 %v614
  %vm622 = vmor %vm620, %vm621
  %v623 = vsel %vm622, %v614, %v619
  %v624 = vmul.f32 %v592, %v613
  %v625 = vmul.f32 %v593, %v623
  %v627 = vperm.slane %v584, 0
  %v629 = vmul.f32 %v624, %v627
  %v630 = vmul.f32 %v625, %v627
  %v632 = vperm.slane %v585, 0
  %v634 = vadd.f32 %v629, %v632
  %v635 = vadd.f32 %v630, %v632
  %v636 = vpack.c.bf16 %v635, %v634
  %v637 = vld [vmem:[%s10] sm:$0xff]
  %v638 = vld [vmem:[%s10 + $0x8] sm:$0xff]
  %v639 = vld [vmem:[%s10 + $0x10] sm:$0xff]
  %v640 = vld [vmem:[%s10 + $0x18] sm:$0xff]
  %v641 = vld [vmem:[%s10 + $0x20] sm:$0xff]
  %v642 = vld [vmem:[%s10 + $0x28] sm:$0xff]
  %v643 = vld [vmem:[%s10 + $0x30] sm:$0xff]
  %v644 = vld [vmem:[%s10 + $0x38] sm:$0xff]
  %v645 = vld [vmem:[%s10 + $0x40] sm:$0xff]
  %v646 = vld [vmem:[%s10 + $0x48] sm:$0xff]
  %v647 = vld [vmem:[%s10 + $0x50] sm:$0xff]
  %v648 = vld [vmem:[%s10 + $0x58] sm:$0xff]
  %v649 = vld [vmem:[%s10 + $0x60] sm:$0xff]
  %v650 = vld [vmem:[%s10 + $0x68] sm:$0xff]
  %v651 = vld [vmem:[%s10 + $0x70] sm:$0xff]
  %v652 = vld [vmem:[%s10 + $0x78] sm:$0xff]
  %v653 = vld [vmem:[%s11] sm:$0x3]
  %v655 = vperm.slane %v653, 0
  %v656 = vperm.slane %v653, 1
  %v675 = vunpack.c.l.b16 %v637
  %v676 = vunpack.c.h.b16 %v637
  %v677 = vunpack.c.l.b16 %v638
  %v678 = vunpack.c.h.b16 %v638
  %v679 = vunpack.c.l.b16 %v639
  %v680 = vunpack.c.h.b16 %v639
  %v681 = vunpack.c.l.b16 %v640
  %v682 = vunpack.c.h.b16 %v640
  %v683 = vunpack.c.l.b16 %v641
  %v684 = vunpack.c.h.b16 %v641
  %v685 = vunpack.c.l.b16 %v642
  %v686 = vunpack.c.h.b16 %v642
  %v687 = vunpack.c.l.b16 %v643
  %v688 = vunpack.c.h.b16 %v643
  %v689 = vunpack.c.l.b16 %v644
  %v690 = vunpack.c.h.b16 %v644
  %v691 = vunpack.c.l.b16 %v645
  %v692 = vunpack.c.h.b16 %v645
  %v693 = vunpack.c.l.b16 %v646
  %v694 = vunpack.c.h.b16 %v646
  %v695 = vunpack.c.l.b16 %v647
  %v696 = vunpack.c.h.b16 %v647
  %v697 = vunpack.c.l.b16 %v648
  %v698 = vunpack.c.h.b16 %v648
  %v699 = vunpack.c.l.b16 %v649
  %v700 = vunpack.c.h.b16 %v649
  %v701 = vunpack.c.l.b16 %v650
  %v702 = vunpack.c.h.b16 %v650
  %v703 = vunpack.c.l.b16 %v651
  %v704 = vunpack.c.h.b16 %v651
  %v705 = vunpack.c.l.b16 %v652
  %v706 = vunpack.c.h.b16 %v652
  %v707 = vpack.c.b16 %v677, %v675
  %v708 = vpack.c.b16 %v678, %v676
  %v709 = vpack.c.b16 %v681, %v679
  %v710 = vpack.c.b16 %v682, %v680
  %v711 = vpack.c.b16 %v685, %v683
  %v712 = vpack.c.b16 %v686, %v684
  %v713 = vpack.c.b16 %v689, %v687
  %v714 = vpack.c.b16 %v690, %v688
  %v715 = vpack.c.b16 %v693, %v691
  %v716 = vpack.c.b16 %v694, %v692
  %v717 = vpack.c.b16 %v697, %v695
  %v718 = vpack.c.b16 %v698, %v696
  %v719 = vpack.c.b16 %v701, %v699
  %v720 = vpack.c.b16 %v702, %v700
  %v721 = vpack.c.b16 %v705, %v703
  %v722 = vpack.c.b16 %v706, %v704
  %739 = vmatpush.bf16.msra.mxu0 %v721
  %740 = vmatpush.bf16.msra.mxu0 %v719
  %741 = vmatpush.bf16.msra.mxu0 %v717
  %742 = vmatpush.bf16.msra.mxu0 %v715
  %743 = vmatpush.bf16.msra.mxu0 %v713
  %744 = vmatpush.bf16.msra.mxu0 %v711
  %745 = vmatpush.bf16.msra.mxu0 %v709
  %746 = vmatpush.bf16.msra.mxu0 %v707
  %747 = vmatmul.bf16.gmra.mxu0 %v636
  %v748 = vpop.f32.mrf.mxu0
  %v749 = vadd.f32 %v655, %v748
  %v750 = vpop.f32.mrf.mxu0
  %v751 = vadd.f32 %v655, %v750
  %752 = vdwg.mxu0
  %753 = vmatpush.bf16.msra.mxu0 %v722
  %754 = vmatpush.bf16.msra.mxu0 %v720
  %755 = vmatpush.bf16.msra.mxu0 %v718
  %756 = vmatpush.bf16.msra.mxu0 %v716
  %757 = vmatpush.bf16.msra.mxu0 %v714
  %758 = vmatpush.bf16.msra.mxu0 %v712
  %759 = vmatpush.bf16.msra.mxu0 %v710
  %760 = vmatpush.bf16.msra.mxu0 %v708
  %761 = vmatmul.bf16.gmra.mxu0 %v636
  %v762 = vpop.f32.mrf.mxu0
  %v763 = vadd.f32 %v656, %v762
  %v764 = vpop.f32.mrf.mxu0
  %v765 = vadd.f32 %v656, %v764
  %766 = vdwg.mxu0
  %v767 = vmul.f32 %v749, %v749
  %v768 = vmul.f32 %v763, %v763
  %v769 = vmul.f32 %v751, %v751
  %v770 = vmul.f32 %v765, %v765
  %v771 = vmul.f32 %v749, %v767
  %v772 = vmul.f32 %v763, %v768
  %v773 = vmul.f32 %v751, %v769
  %v774 = vmul.f32 %v765, %v770
  %v775 = vmul.f32 %v771, 0.044715
  %v776 = vmul.f32 %v772, 0.044715
  %v777 = vmul.f32 %v773, 0.044715
  %v778 = vmul.f32 %v774, 0.044715
  %v779 = vadd.f32 %v749, %v775
  %v780 = vadd.f32 %v763, %v776
  %v781 = vadd.f32 %v751, %v777
  %v782 = vadd.f32 %v765, %v778
  %v783 = vmul.f32 %v779, 0.7978846
  %v784 = vmul.f32 %v780, 0.7978846
  %v785 = vmul.f32 %v781, 0.7978846
  %v786 = vmul.f32 %v782, 0.7978846
  %v787 = vtanh.pop %v783
  %v788 = vtanh.pop %v784
  %v789 = vtanh.pop %v785
  %v790 = vtanh.pop %v786
  %v791 = vadd.f32 %v787, 1.0
  %v792 = vadd.f32 %v788, 1.0
  %v793 = vadd.f32 %v789, 1.0
  %v794 = vadd.f32 %v790, 1.0
  %v795 = vmul.f32 %v791, 0.5
  %v796 = vmul.f32 %v792, 0.5
  %v797 = vmul.f32 %v793, 0.5
  %v798 = vmul.f32 %v794, 0.5
  %v799 = vmul.f32 %v749, %v795
  %v800 = vmul.f32 %v763, %v796
  %v801 = vmul.f32 %v751, %v797
  %v802 = vmul.f32 %v765, %v798
  %v803 = vpack.c.bf16 %v801, %v799
  %v804 = vpack.c.bf16 %v802, %v800
  %v805 = vld [vmem:[%s12] sm:$0xf]
  %v806 = vld [vmem:[%s12 + $0x4] sm:$0xf]
  %v807 = vld [vmem:[%s12 + $0x8] sm:$0xf]
  %v808 = vld [vmem:[%s12 + $0xc] sm:$0xf]
  %v809 = vld [vmem:[%s12 + $0x10] sm:$0xf]
  %v810 = vld [vmem:[%s12 + $0x14] sm:$0xf]
  %v811 = vld [vmem:[%s12 + $0x18] sm:$0xf]
  %v812 = vld [vmem:[%s12 + $0x1c] sm:$0xf]
  %v813 = vld [vmem:[%s12 + $0x20] sm:$0xf]
  %v814 = vld [vmem:[%s12 + $0x24] sm:$0xf]
  %v815 = vld [vmem:[%s12 + $0x28] sm:$0xf]
  %v816 = vld [vmem:[%s12 + $0x2c] sm:$0xf]
  %v817 = vld [vmem:[%s12 + $0x30] sm:$0xf]
  %v818 = vld [vmem:[%s12 + $0x34] sm:$0xf]
  %v819 = vld [vmem:[%s12 + $0x38] sm:$0xf]
  %v820 = vld [vmem:[%s12 + $0x3c] sm:$0xf]
  %v821 = vld [vmem:[%s12 + $0x40] sm:$0xf]
  %v822 = vld [vmem:[%s12 + $0x44] sm:$0xf]
  %v823 = vld [vmem:[%s12 + $0x48] sm:$0xf]
  %v824 = vld [vmem:[%s12 + $0x4c] sm:$0xf]
  %v825 = vld [vmem:[%s12 + $0x50] sm:$0xf]
  %v826 = vld [vmem:[%s12 + $0x54] sm:$0xf]
  %v827 = vld [vmem:[%s12 + $0x58] sm:$0xf]
  %v828 = vld [vmem:[%s12 + $0x5c] sm:$0xf]
  %v829 = vld [vmem:[%s12 + $0x60] sm:$0xf]
  %v830 = vld [vmem:[%s12 + $0x64] sm:$0xf]
  %v831 = vld [vmem:[%s12 + $0x68] sm:$0xf]
  %v832 = vld [vmem:[%s12 + $0x6c] sm:$0xf]
  %v833 = vld [vmem:[%s12 + $0x70] sm:$0xf]
  %v834 = vld [vmem:[%s12 + $0x74] sm:$0xf]
  %v835 = vld [vmem:[%s12 + $0x78] sm:$0xf]
  %v836 = vld [vmem:[%s12 + $0x7c] sm:$0xf]
  %v837 = vld [vmem:[%s13] sm:$0x1]
  %v839 = vperm.slane %v837, 0
  %v873 = vunpack.c.l.b16 %v805
  %v874 = vunpack.c.l.b16 %v806
  %v875 = vunpack.c.l.b16 %v807
  %v876 = vunpack.c.l.b16 %v808
  %v877 = vunpack.c.l.b16 %v809
  %v878 = vunpack.c.l.b16 %v810
  %v879 = vunpack.c.l.b16 %v811
  %v880 = vunpack.c.l.b16 %v812
  %v881 = vunpack.c.l.b16 %v813
  %v882 = vunpack.c.l.b16 %v814
  %v883 = vunpack.c.l.b16 %v815
  %v884 = vunpack.c.l.b16 %v816
  %v885 = vunpack.c.l.b16 %v817
  %v886 = vunpack.c.l.b16 %v818
  %v887 = vunpack.c.l.b16 %v819
  %v888 = vunpack.c.l.b16 %v820
  %v889 = vunpack.c.l.b16 %v821
  %v890 = vunpack.c.l.b16 %v822
  %v891 = vunpack.c.l.b16 %v823
  %v892 = vunpack.c.l.b16 %v824
  %v893 = vunpack.c.l.b16 %v825
  %v894 = vunpack.c.l.b16 %v826
  %v895 = vunpack.c.l.b16 %v827
  %v896 = vunpack.c.l.b16 %v828
  %v897 = vunpack.c.l.b16 %v829
  %v898 = vunpack.c.l.b16 %v830
  %v899 = vunpack.c.l.b16 %v831
  %v900 = vunpack.c.l.b16 %v832
  %v901 = vunpack.c.l.b16 %v833
  %v902 = vunpack.c.l.b16 %v834
  %v903 = vunpack.c.l.b16 %v835
  %v904 = vunpack.c.l.b16 %v836
  %v905 = vpack.c.b16 %v874, %v873
  %v906 = vpack.c.b16 %v876, %v875
  %v907 = vpack.c.b16 %v878, %v877
  %v908 = vpack.c.b16 %v880, %v879
  %v909 = vpack.c.b16 %v882, %v881
  %v910 = vpack.c.b16 %v884, %v883
  %v911 = vpack.c.b16 %v886, %v885
  %v912 = vpack.c.b16 %v888, %v887
  %v913 = vpack.c.b16 %v890, %v889
  %v914 = vpack.c.b16 %v892, %v891
  %v915 = vpack.c.b16 %v894, %v893
  %v916 = vpack.c.b16 %v896, %v895
  %v917 = vpack.c.b16 %v898, %v897
  %v918 = vpack.c.b16 %v900, %v899
  %v919 = vpack.c.b16 %v902, %v901
  %v920 = vpack.c.b16 %v904, %v903
  %937 = vmatpush.bf16.msra.mxu0 %v912
  %938 = vmatpush.bf16.msra.mxu0 %v911
  %939 = vmatpush.bf16.msra.mxu0 %v910
  %940 = vmatpush.bf16.msra.mxu0 %v909
  %941 = vmatpush.bf16.msra.mxu0 %v908
  %942 = vmatpush.bf16.msra.mxu0 %v907
  %943 = vmatpush.bf16.msra.mxu0 %v906
  %944 = vmatpush.bf16.msra.mxu0 %v905
  %945 = vmatmul.bf16.gmra.mxu0 %v803
  %v946 = vpop.f32.mrf.mxu0
  %v947 = vadd.f32 %v839, %v946
  %v948 = vpop.f32.mrf.mxu0
  %v949 = vadd.f32 %v839, %v948
  %950 = vdwg.mxu0
  %951 = vmatpush.bf16.msra.mxu0 %v920
  %952 = vmatpush.bf16.msra.mxu0 %v919
  %953 = vmatpush.bf16.msra.mxu0 %v918
  %954 = vmatpush.bf16.msra.mxu0 %v917
  %955 = vmatpush.bf16.msra.mxu0 %v916
  %956 = vmatpush.bf16.msra.mxu0 %v915
  %957 = vmatpush.bf16.msra.mxu0 %v914
  %958 = vmatpush.bf16.msra.mxu0 %v913
  %959 = vmatmul.bf16.gmra.mxu0 %v804
  %v960 = vpop.f32.mrf.mxu0
  %v961 = vadd.f32 %v947, %v960
  %v962 = vpop.f32.mrf.mxu0
  %v963 = vadd.f32 %v949, %v962
  %964 = vdwg.mxu0
  %v965 = vadd.f32 %v634, %v961
  %v966 = vadd.f32 %v635, %v963
  %v967 = vld [vmem:[%s14] sm:$0x1]
  %v968 = vld [vmem:[%s15] sm:$0x1]
  %969 = vadd.xlane.f32.xlu0 %v965
  %v970 = vpop.xlane.xlu0 %969
  %971 = vadd.xlane.f32.xlu0 %v966
  %v972 = vpop.xlane.xlu0 %971
  %v973 = vmul.f32 %v970, %v84
  %v974 = vmul.f32 %v972, %v84
  %v975 = vsub.f32 %v965, %v973
  %v976 = vsub.f32 %v966, %v974
  %v977 = vmul.f32 %v975, %v975
  %v978 = vmul.f32 %v976, %v976
  %979 = vadd.xlane.f32.xlu0 %v977
  %v980 = vpop.xlane.xlu0 %979
  %981 = vadd.xlane.f32.xlu0 %v978
  %v982 = vpop.xlane.xlu0 %981
  %v983 = vmul.f32 %v980, %v84
  %v984 = vmul.f32 %v982, %v84
  %v985 = vadd.f32 %v983, 1e-05
  %v986 = vadd.f32 %v984, 1e-05
  %v987 = vrsqrt.pop %v985
  %v988 = vmul.f32 %v987, %v985
  %v989 = vmul.f32 %v988, %v987
  %v990 = vmul.f32 0.5, %v989
  %v991 = vsub.f32 1.5, %v990
  %v992 = vmul.f32 %v987, %v991
  %vm993 = vweird.f32 %v985
  %vm994 = vweird.f32 %v987
  %vm995 = vmor %vm993, %vm994
  %v996 = vsel %vm995, %v987, %v992
  %v997 = vrsqrt.pop %v986
  %v998 = vmul.f32 %v997, %v986
  %v999 = vmul.f32 %v998, %v997
  %v1000 = vmul.f32 0.5, %v999
  %v1001 = vsub.f32 1.5, %v1000
  %v1002 = vmul.f32 %v997, %v1001
  %vm1003 = vweird.f32 %v986
  %vm1004 = vweird.f32 %v997
  %vm1005 = vmor %vm1003, %vm1004
  %v1006 = vsel %vm1005, %v997, %v1002
  %v1007 = vmul.f32 %v975, %v996
  %v1008 = vmul.f32 %v976, %v1006
  %v1010 = vperm.slane %v967, 0
  %v1012 = vmul.f32 %v1007, %v1010
  %v1013 = vmul.f32 %v1008, %v1010
  %v1015 = vperm.slane %v968, 0
  %v1017 = vadd.f32 %v1012, %v1015
  %v1018 = vadd.f32 %v1013, %v1015
  %v1019 = vpack.c.bf16 %v1018, %v1017
  %v1020 = vld [vmem:[%s16] sm:$0xf]
  %v1021 = vld [vmem:[%s16 + $0x4] sm:$0xf]
  %v1022 = vld [vmem:[%s16 + $0x8] sm:$0xf]
  %v1023 = vld [vmem:[%s16 + $0xc] sm:$0xf]
  %v1024 = vld [vmem:[%s16 + $0x10] sm:$0xf]
  %v1025 = vld [vmem:[%s16 + $0x14] sm:$0xf]
  %v1026 = vld [vmem:[%s16 + $0x18] sm:$0xf]
  %v1027 = vld [vmem:[%s16 + $0x1c] sm:$0xf]
  %v1028 = vld [vmem:[%s16 + $0x20] sm:$0xf]
  %v1029 = vld [vmem:[%s16 + $0x24] sm:$0xf]
  %v1030 = vld [vmem:[%s16 + $0x28] sm:$0xf]
  %v1031 = vld [vmem:[%s16 + $0x2c] sm:$0xf]
  %v1032 = vld [vmem:[%s16 + $0x30] sm:$0xf]
  %v1033 = vld [vmem:[%s16 + $0x34] sm:$0xf]
  %v1034 = vld [vmem:[%s16 + $0x38] sm:$0xf]
  %v1035 = vld [vmem:[%s16 + $0x3c] sm:$0xf]
  %v1036 = vld [vmem:[%s17] sm:$0x1]
  %v1038 = vperm.slane %v1036, 0
  %v1056 = vunpack.c.l.b16 %v1020
  %v1057 = vunpack.c.l.b16 %v1021
  %v1058 = vunpack.c.l.b16 %v1022
  %v1059 = vunpack.c.l.b16 %v1023
  %v1060 = vunpack.c.l.b16 %v1024
  %v1061 = vunpack.c.l.b16 %v1025
  %v1062 = vunpack.c.l.b16 %v1026
  %v1063 = vunpack.c.l.b16 %v1027
  %v1064 = vunpack.c.l.b16 %v1028
  %v1065 = vunpack.c.l.b16 %v1029
  %v1066 = vunpack.c.l.b16 %v1030
  %v1067 = vunpack.c.l.b16 %v1031
  %v1068 = vunpack.c.l.b16 %v1032
  %v1069 = vunpack.c.l.b16 %v1033
  %v1070 = vunpack.c.l.b16 %v1034
  %v1071 = vunpack.c.l.b16 %v1035
  %v1072 = vpack.c.b16 %v1057, %v1056
  %v1073 = vpack.c.b16 %v1059, %v1058
  %v1074 = vpack.c.b16 %v1061, %v1060
  %v1075 = vpack.c.b16 %v1063, %v1062
  %v1076 = vpack.c.b16 %v1065, %v1064
  %v1077 = vpack.c.b16 %v1067, %v1066
  %v1078 = vpack.c.b16 %v1069, %v1068
  %v1079 = vpack.c.b16 %v1071, %v1070
  %1088 = vmatpush.bf16.msra.mxu0 %v1079
  %1089 = vmatpush.bf16.msra.mxu0 %v1078
  %1090 = vmatpush.bf16.msra.mxu0 %v1077
  %1091 = vmatpush.bf16.msra.mxu0 %v1076
  %1092 = vmatpush.bf16.msra.mxu0 %v1075
  %1093 = vmatpush.bf16.msra.mxu0 %v1074
  %1094 = vmatpush.bf16.msra.mxu0 %v1073
  %1095 = vmatpush.bf16.msra.mxu0 %v1072
  %1096 = vmatmul.bf16.gmra.mxu0 %v1019
  %v1097 = vpop.f32.mrf.mxu0
  %v1098 = vadd.f32 %v1038, %v1097
  %v1099 = vpop.f32.mrf.mxu0
  %v1100 = vadd.f32 %v1038, %v1099
  %1101 = vdwg.mxu0
  %v1102 = vtanh.pop %v1098
  %v1103 = vtanh.pop %v1100
  %v1104 = vld [vmem:[%s18] sm:$0x1]
  %v1106 = vperm.slane %v1104, 0
  %v1108 = vmul.f32 %v1102, %v1106
  %v1109 = vmul.f32 %v1103, %v1106
  %1110 = vadd.xlane.f32.xlu0 %v1108
  %v1111 = vpop.xlane.xlu0 %1110
  %1112 = vadd.xlane.f32.xlu0 %v1109
  %v1113 = vpop.xlane.xlu0 %1112
  %v1114 = vld [vmem:[#allocation2] sm:$0x1]
  %v1116 = vperm.slane %v1114, 0
  %v1118 = vadd.f32 %v1111, %v1116
  %v1119 = vadd.f32 %v1113, %v1116
  %1121 = vset.pattern.permute.xlu0 0
  %1122 = vperm.xlu0 %1121, %v1118
  %v1123 = vpop.permute.xlu0 %1122
  %1126 = vset.pattern.permute.xlu0 0
  %1127 = vperm.xlu0 %1126, %v1119
  %v1128 = vpop.permute.xlu0 %1127
  %1130 = vst [vmem:[%s20] sm:$0xff] %v1123
  %1131 = vst [vmem:[%s20 + $0x8] sm:$0xff] %v1128
  // Predicated region
  $region82: #{bert_arch_forward.1} parent=0 // pred_check
    _
  $region83: #{bert_arch_forward.1} parent=0 // pred_check_branch
    %1133 = sbr.rel (0) target = $region85
  $region84: #{bert_arch_forward.1} parent=0 // pred_region
    _
  $region85: #{bert_arch_forward.1} parent=0 // pred_fallthru
    _
  // Predicated region
  $region86: #{bert_arch_forward.1} parent=0 // pred_check
    _
  $region87: #{bert_arch_forward.1} parent=0 // pred_check_branch
    %1135 = sbr.rel (0) target = $region89
  $region88: #{bert_arch_forward.1} parent=0 // pred_region
    _
  $region89: #{bert_arch_forward.1} parent=0 // pred_fallthru
    _

</llo_original>
